<compile_context>
chip_gen: v7x
topology: tpu7x:2x2x1
jax: 0.10.0
libtpu: 0.0.40
codegen_flags: <defaults>
</compile_context>

<pallas_src>
import jax
import jax.numpy as jnp
from jax.experimental import pallas as pl

BN_EPS = 1e-5      # PyTorch BatchNorm1d default eps
LANE = 128         # vreg lane width
SUBLANE = 8        # vreg sublane count (f32)


def _round_up(x, m):
    return (x + m - 1) // m * m


def _pad2d(a, rows, cols):
    return jnp.pad(a, ((0, rows - a.shape[0]), (0, cols - a.shape[1])))


def _full_spec(shape):
    # Whole array as a single block (no grid), resident in VMEM.
    return pl.BlockSpec(shape, lambda: (0,) * len(shape))


# ---------------------------------------------------------------------------
# Fused kernel (built per (num_hidden, batch) configuration; layer loop is
# unrolled at trace time, so everything stays inside one kernel body).
# ---------------------------------------------------------------------------
def _make_fused_mlp_kernel(num_hidden, n_valid, n_pad):
    """Kernel arg order: x, [w_i, gamma_i, beta_i] * num_hidden, w_f, b_f, out."""
    need_mask = n_pad != n_valid
    inv_n = 1.0 / float(n_valid)

    def kernel(*refs):
        x_ref = refs[0]
        o_ref = refs[-1]
        params = refs[1:-1]

        h = x_ref[...]                                   # (n_pad, in_pad)

        if need_mask:
            row_ids = jax.lax.broadcasted_iota(jnp.int32, (n_pad, 1), 0)
            row_mask = (row_ids < n_valid).astype(jnp.float32)

        for i in range(num_hidden):
            w = params[3 * i][...]                       # (d_in_pad, d_out_pad)
            gamma = params[3 * i + 1][...]               # (1, d_out_pad)
            beta = params[3 * i + 2][...]                # (1, d_out_pad)

            # Hidden-layer bias intentionally omitted: BN mean subtraction
            # cancels it exactly, so dropping it is numerically identical.
            y = jnp.dot(h, w, preferred_element_type=jnp.float32)

            # BatchNorm (training mode): biased batch statistics over the
            # true batch rows only (padded rows masked out).
            if need_mask:
                mean = jnp.sum(y * row_mask, axis=0, keepdims=True) * inv_n
                diff = y - mean
                var = jnp.sum(diff * diff * row_mask, axis=0, keepdims=True) * inv_n
            else:
                mean = jnp.sum(y, axis=0, keepdims=True) * inv_n
                diff = y - mean
                var = jnp.sum(diff * diff, axis=0, keepdims=True) * inv_n

            z = diff * jax.lax.rsqrt(var + BN_EPS) * gamma + beta
            h = jnp.maximum(z, 0.0)                      # ReLU

        w_f = params[3 * num_hidden][...]                # (d_pad, out_pad)
        b_f = params[3 * num_hidden + 1][...]            # (1, out_pad)
        o_ref[...] = jnp.dot(h, w_f, preferred_element_type=jnp.float32) + b_f

    return kernel


# ---------------------------------------------------------------------------
# Wrapper: pad to lane/sublane-friendly shapes, single pallas_call, slice back.
# ---------------------------------------------------------------------------
def mlp_forward(params, x):
    num_layers = params["num_layers"]
    num_hidden = num_layers - 1 if num_layers > 1 else 0
    linears = params["linears"]

    n, in_dim = x.shape
    dims = [in_dim] + [w.shape[1] for (w, _b) in linears]       # per-layer widths
    dims_pad = [_round_up(d, LANE) for d in dims]
    n_pad = _round_up(max(n, 1), SUBLANE)

    x_p = _pad2d(x.astype(jnp.float32), n_pad, dims_pad[0])

    kernel_inputs = [x_p]
    in_specs = [_full_spec(x_p.shape)]

    # Hidden layers: W (bias dropped, cancelled by BN), gamma, beta.
    for i in range(num_hidden):
        w, _b = linears[i]
        gamma, beta = params["batch_norms"][i]
        w_p = _pad2d(w.astype(jnp.float32), dims_pad[i], dims_pad[i + 1])
        g_p = _pad2d(gamma.reshape(1, -1).astype(jnp.float32), 1, dims_pad[i + 1])
        be_p = _pad2d(beta.reshape(1, -1).astype(jnp.float32), 1, dims_pad[i + 1])
        for a in (w_p, g_p, be_p):
            kernel_inputs.append(a)
            in_specs.append(_full_spec(a.shape))

    # Final (or only) linear layer keeps its bias.
    w_f, b_f = linears[-1]
    w_fp = _pad2d(w_f.astype(jnp.float32), dims_pad[-2], dims_pad[-1])
    b_fp = _pad2d(b_f.reshape(1, -1).astype(jnp.float32), 1, dims_pad[-1])
    kernel_inputs += [w_fp, b_fp]
    in_specs += [_full_spec(w_fp.shape), _full_spec(b_fp.shape)]

    out_shape_p = (n_pad, dims_pad[-1])
    kernel = _make_fused_mlp_kernel(num_hidden, n, n_pad)

    out_p = pl.pallas_call(
        kernel,
        out_shape=jax.ShapeDtypeStruct(out_shape_p, jnp.float32),
        in_specs=in_specs,
        out_specs=_full_spec(out_shape_p),
    )(*kernel_inputs)

    return out_p[:n, : dims[-1]]


# ---------------------------------------------------------------------------
# Parameter construction (shapes match the PyTorch module)
# ---------------------------------------------------------------------------
def init_mlp_params(key, num_layers, input_dim, hidden_dim, output_dim):
    if num_layers < 1:
        raise ValueError("number of layers should be positive!")
    params = {"num_layers": num_layers, "linears": [], "batch_norms": []}
    if num_layers == 1:
        key, k = jax.random.split(key)
        w = jax.random.normal(k, (input_dim, output_dim), jnp.float32) * 0.1
        b = jnp.zeros((output_dim,), jnp.float32)
        params["linears"].append((w, b))
        return params

    dims = [input_dim] + [hidden_dim] * (num_layers - 1) + [output_dim]
    for i in range(num_layers):
        key, k = jax.random.split(key)
        w = jax.random.normal(k, (dims[i], dims[i + 1]), jnp.float32) * 0.1
        b = jnp.full((dims[i + 1],), 0.01 * (i + 1), jnp.float32)
        params["linears"].append((w, b))
    for i in range(num_layers - 1):
        gamma = jnp.ones((hidden_dim,), jnp.float32)
        beta = jnp.zeros((hidden_dim,), jnp.float32)
        params["batch_norms"].append((gamma, beta))
    return params


# ---------------------------------------------------------------------------
# Pure-JAX reference (includes the hidden biases -> verifies BN cancellation)
# ---------------------------------------------------------------------------
def mlp_forward_ref(params, x):
    num_layers = params["num_layers"]
    if num_layers == 1:
        w, b = params["linears"][0]
        return x @ w + b
    h = x
    for layer in range(num_layers - 1):
        w, b = params["linears"][layer]
        gamma, beta = params["batch_norms"][layer]
        y = h @ w + b
        mean = jnp.mean(y, axis=0, keepdims=True)
        var = jnp.mean((y - mean) ** 2, axis=0, keepdims=True)
        y_hat = (y - mean) / jnp.sqrt(var + BN_EPS)
        h = jnp.maximum(y_hat * gamma + beta, 0.0)
    w, b = params["linears"][num_layers - 1]
    return h @ w + b


if __name__ == "__main__":
    key = jax.random.PRNGKey(0)
    num_layers, input_dim, hidden_dim, output_dim = 3, 16, 32, 8
    batch = 8

    kx, kp = jax.random.split(key)
    x = jax.random.normal(kx, (batch, input_dim), jnp.float32)
    params = init_mlp_params(kp, num_layers, input_dim, hidden_dim, output_dim)

    out = jax.block_until_ready(mlp_forward(params, x))
    ref = mlp_forward_ref(params, x)
    assert out.shape == (batch, output_dim)
    assert jnp.allclose(out, ref, atol=1e-4, rtol=1e-4), "mismatch vs. JAX reference"

    # Also exercise the num_layers == 1 (pure linear) path.
    params1 = init_mlp_params(kp, 1, input_dim, hidden_dim, output_dim)
    out1 = jax.block_until_ready(mlp_forward(params1, x))
    ref1 = mlp_forward_ref(params1, x)
    assert jnp.allclose(out1, ref1, atol=1e-4, rtol=1e-4), "mismatch (linear path)"

    print("KERNEL_OK")
</pallas_src>

<mosaic_0001>
module attributes {stable_mosaic.version = 11 : i64} {
  func.func @kernel(%arg0: memref<8x128xf32, #tpu.memory_space<vmem>>, %arg1: memref<128x128xf32, #tpu.memory_space<vmem>>, %arg2: memref<1x128xf32, #tpu.memory_space<vmem>>, %arg3: memref<1x128xf32, #tpu.memory_space<vmem>>, %arg4: memref<128x128xf32, #tpu.memory_space<vmem>>, %arg5: memref<1x128xf32, #tpu.memory_space<vmem>>, %arg6: memref<1x128xf32, #tpu.memory_space<vmem>>, %arg7: memref<128x128xf32, #tpu.memory_space<vmem>>, %arg8: memref<1x128xf32, #tpu.memory_space<vmem>>, %arg9: memref<8x128xf32, #tpu.memory_space<vmem>>) attributes {dimension_semantics = [], scalar_prefetch = 0 : i64, scratch_operands = 0 : i64, tpu.core_type = #tpu.core_type<tc>} {
    %c0 = arith.constant 0 : index
    %c0_0 = arith.constant 0 : index
    %0 = vector.load %arg0[%c0, %c0_0] : memref<8x128xf32, #tpu.memory_space<vmem>>, vector<8x128xf32>
    %c0_1 = arith.constant 0 : index
    %c0_2 = arith.constant 0 : index
    %1 = vector.load %arg1[%c0_1, %c0_2] : memref<128x128xf32, #tpu.memory_space<vmem>>, vector<128x128xf32>
    %c0_3 = arith.constant 0 : index
    %c0_4 = arith.constant 0 : index
    %2 = vector.load %arg2[%c0_3, %c0_4] : memref<1x128xf32, #tpu.memory_space<vmem>>, vector<1x128xf32>
    %c0_5 = arith.constant 0 : index
    %c0_6 = arith.constant 0 : index
    %3 = vector.load %arg3[%c0_5, %c0_6] : memref<1x128xf32, #tpu.memory_space<vmem>>, vector<1x128xf32>
    %cst = arith.constant dense<0.000000e+00> : vector<8x128xf32>
    %4 = tpu.matmul %0, %1, %cst {dimension_numbers = #tpu.dot_dimension_numbers<[1], [0], [0], [1], [0, 0, 1, 1], [], []>} : vector<8x128xf32>, vector<128x128xf32>, vector<8x128xf32> -> vector<8x128xf32>
    %cst_7 = arith.constant dense<0.000000e+00> : vector<128xf32>
    %5 = vector.multi_reduction <add>, %4, %cst_7 [0] : vector<8x128xf32> to vector<128xf32>
    %6 = vector.shape_cast %5 : vector<128xf32> to vector<1x128xf32>
    %cst_8 = arith.constant 1.250000e-01 : f32
    %7 = vector.broadcast %cst_8 : f32 to vector<1x128xf32>
    %8 = arith.mulf %6, %7 : vector<1x128xf32>
    %9 = vector.broadcast %8 : vector<1x128xf32> to vector<8x128xf32>
    %10 = arith.subf %4, %9 : vector<8x128xf32>
    %11 = arith.mulf %10, %10 : vector<8x128xf32>
    %cst_9 = arith.constant dense<0.000000e+00> : vector<128xf32>
    %12 = vector.multi_reduction <add>, %11, %cst_9 [0] : vector<8x128xf32> to vector<128xf32>
    %13 = vector.shape_cast %12 : vector<128xf32> to vector<1x128xf32>
    %cst_10 = arith.constant 1.250000e-01 : f32
    %14 = vector.broadcast %cst_10 : f32 to vector<1x128xf32>
    %15 = arith.mulf %13, %14 : vector<1x128xf32>
    %cst_11 = arith.constant 9.99999974E-6 : f32
    %16 = vector.broadcast %cst_11 : f32 to vector<1x128xf32>
    %17 = arith.addf %15, %16 : vector<1x128xf32>
    %18 = math.rsqrt %17 : vector<1x128xf32>
    %19 = vector.broadcast %18 : vector<1x128xf32> to vector<8x128xf32>
    %20 = arith.mulf %10, %19 : vector<8x128xf32>
    %21 = vector.broadcast %2 : vector<1x128xf32> to vector<8x128xf32>
    %22 = arith.mulf %20, %21 : vector<8x128xf32>
    %23 = vector.broadcast %3 : vector<1x128xf32> to vector<8x128xf32>
    %24 = arith.addf %22, %23 : vector<8x128xf32>
    %cst_12 = arith.constant 0.000000e+00 : f32
    %25 = vector.broadcast %cst_12 : f32 to vector<8x128xf32>
    %26 = arith.maximumf %24, %25 : vector<8x128xf32>
    %c0_13 = arith.constant 0 : index
    %c0_14 = arith.constant 0 : index
    %27 = vector.load %arg4[%c0_13, %c0_14] : memref<128x128xf32, #tpu.memory_space<vmem>>, vector<128x128xf32>
    %c0_15 = arith.constant 0 : index
    %c0_16 = arith.constant 0 : index
    %28 = vector.load %arg5[%c0_15, %c0_16] : memref<1x128xf32, #tpu.memory_space<vmem>>, vector<1x128xf32>
    %c0_17 = arith.constant 0 : index
    %c0_18 = arith.constant 0 : index
    %29 = vector.load %arg6[%c0_17, %c0_18] : memref<1x128xf32, #tpu.memory_space<vmem>>, vector<1x128xf32>
    %cst_19 = arith.constant dense<0.000000e+00> : vector<8x128xf32>
    %30 = tpu.matmul %26, %27, %cst_19 {dimension_numbers = #tpu.dot_dimension_numbers<[1], [0], [0], [1], [0, 0, 1, 1], [], []>} : vector<8x128xf32>, vector<128x128xf32>, vector<8x128xf32> -> vector<8x128xf32>
    %cst_20 = arith.constant dense<0.000000e+00> : vector<128xf32>
    %31 = vector.multi_reduction <add>, %30, %cst_20 [0] : vector<8x128xf32> to vector<128xf32>
    %32 = vector.shape_cast %31 : vector<128xf32> to vector<1x128xf32>
    %cst_21 = arith.constant 1.250000e-01 : f32
    %33 = vector.broadcast %cst_21 : f32 to vector<1x128xf32>
    %34 = arith.mulf %32, %33 : vector<1x128xf32>
    %35 = vector.broadcast %34 : vector<1x128xf32> to vector<8x128xf32>
    %36 = arith.subf %30, %35 : vector<8x128xf32>
    %37 = arith.mulf %36, %36 : vector<8x128xf32>
    %cst_22 = arith.constant dense<0.000000e+00> : vector<128xf32>
    %38 = vector.multi_reduction <add>, %37, %cst_22 [0] : vector<8x128xf32> to vector<128xf32>
    %39 = vector.shape_cast %38 : vector<128xf32> to vector<1x128xf32>
    %cst_23 = arith.constant 1.250000e-01 : f32
    %40 = vector.broadcast %cst_23 : f32 to vector<1x128xf32>
    %41 = arith.mulf %39, %40 : vector<1x128xf32>
    %cst_24 = arith.constant 9.99999974E-6 : f32
    %42 = vector.broadcast %cst_24 : f32 to vector<1x128xf32>
    %43 = arith.addf %41, %42 : vector<1x128xf32>
    %44 = math.rsqrt %43 : vector<1x128xf32>
    %45 = vector.broadcast %44 : vector<1x128xf32> to vector<8x128xf32>
    %46 = arith.mulf %36, %45 : vector<8x128xf32>
    %47 = vector.broadcast %28 : vector<1x128xf32> to vector<8x128xf32>
    %48 = arith.mulf %46, %47 : vector<8x128xf32>
    %49 = vector.broadcast %29 : vector<1x128xf32> to vector<8x128xf32>
    %50 = arith.addf %48, %49 : vector<8x128xf32>
    %cst_25 = arith.constant 0.000000e+00 : f32
    %51 = vector.broadcast %cst_25 : f32 to vector<8x128xf32>
    %52 = arith.maximumf %50, %51 : vector<8x128xf32>
    %c0_26 = arith.constant 0 : index
    %c0_27 = arith.constant 0 : index
    %53 = vector.load %arg7[%c0_26, %c0_27] : memref<128x128xf32, #tpu.memory_space<vmem>>, vector<128x128xf32>
    %c0_28 = arith.constant 0 : index
    %c0_29 = arith.constant 0 : index
    %54 = vector.load %arg8[%c0_28, %c0_29] : memref<1x128xf32, #tpu.memory_space<vmem>>, vector<1x128xf32>
    %cst_30 = arith.constant dense<0.000000e+00> : vector<8x128xf32>
    %55 = tpu.matmul %52, %53, %cst_30 {dimension_numbers = #tpu.dot_dimension_numbers<[1], [0], [0], [1], [0, 0, 1, 1], [], []>} : vector<8x128xf32>, vector<128x128xf32>, vector<8x128xf32> -> vector<8x128xf32>
    %56 = vector.broadcast %54 : vector<1x128xf32> to vector<8x128xf32>
    %57 = arith.addf %55, %56 : vector<8x128xf32>
    %c0_31 = arith.constant 0 : index
    %c0_32 = arith.constant 0 : index
    %58 = vector.load %arg9[%c0_31, %c0_32] : memref<8x128xf32, #tpu.memory_space<vmem>>, vector<8x128xf32>
    tpu.vector_store %arg9[%c0_31, %c0_32], %57 {strides = array<i32>} : memref<8x128xf32, #tpu.memory_space<vmem>>, vector<8x128xf32>,
    return
  }
}

</mosaic_0001>

<llo_original>
// kernel: tpu_custom_call.1
$region0: #{tpu_custom_call.1}
  #allocation0 [shape = 'u32[]', space=smem, size = 0x4, offset = 0x4, fixed_abs, tag = 'smem constant byte address 0x4 - core index']
  #allocation1 [shape = 'u32[144,128]{1,0:T(1,128)}', space=vmem, size = 0x12000, scoped, tag = 'internal scratch']
  %s0 = inlined_call_operand.hbm [shape: f32[8,128], index: 0, kind: input, shape index: {}]
  %s1 = inlined_call_operand.hbm [shape: f32[128,128], index: 1, kind: input, shape index: {}]
  %s2 = inlined_call_operand.vmem [shape: f32[1,128], index: 2, kind: input, shape index: {}]
  %s3 = inlined_call_operand.vmem [shape: f32[1,128], index: 3, kind: input, shape index: {}]
  %s4 = inlined_call_operand.hbm [shape: f32[128,128], index: 4, kind: input, shape index: {}]
  %s5 = inlined_call_operand.vmem [shape: f32[1,128], index: 5, kind: input, shape index: {}]
  %s6 = inlined_call_operand.vmem [shape: f32[1,128], index: 6, kind: input, shape index: {}]
  %s7 = inlined_call_operand.hbm [shape: f32[128,128], index: 7, kind: input, shape index: {}]
  %s8 = inlined_call_operand.vmem [shape: f32[1,128], index: 8, kind: input, shape index: {}]
  %s9 = inlined_call_operand.hbm [shape: f32[8,128], index: 9, kind: output, shape index: {}]
  %s10 = sld [smem:[#allocation0]]
  $region62: #{tpu_custom_call.1} parent=0
    _
  %s12 = ssub.s32 1, %s10
  %s13 = scalar_select 0, %s12, %s10
  $region1: #{tpu_custom_call.1} parent=0
    #allocation2 [shape = 'u8[4096]{0}', space=vmem, size = 0x1000, scoped, tag = 'input window, operand 0, single buffered']
    #allocation3 [shape = 's32[1]{0}', space=sflag, size = 0x4, scoped, tag = 'scoped memory for tpu_custom_call.1']
    #allocation4 [shape = 's32[1]{0}', space=sflag, size = 0x4, scoped, tag = 'scoped memory for tpu_custom_call.1']
    #allocation5 [shape = 'u8[65536]{0}', space=vmem, size = 0x10000, scoped, tag = 'input window, operand 1, single buffered']
    #allocation6 [shape = 's32[1]{0}', space=sflag, size = 0x4, scoped, tag = 'scoped memory for tpu_custom_call.1']
    #allocation7 [shape = 'u8[65536]{0}', space=vmem, size = 0x10000, scoped, tag = 'input window, operand 4, single buffered']
    #allocation8 [shape = 'u8[65536]{0}', space=vmem, size = 0x10000, scoped, tag = 'input window, operand 7, single buffered']
    #allocation9 [shape = 's32[1]{0}', space=sflag, size = 0x4, scoped, tag = 'scoped memory for tpu_custom_call.1']
    #allocation10 [shape = 'u8[4096]{0}', space=vmem, size = 0x1000, scoped, tag = 'output window, operand 0, single buffered']
    %14 = vsyncpa [#allocation3], 0
    %15 = vsyncpa [#allocation6], 0
    %16 = vsyncpa [#allocation9], 0
    %17 = vsyncpa [#allocation4], 0
    // Predicated region
    $region2: #{tpu_custom_call.1} parent=1 // pred_check
      _
    $region3: #{tpu_custom_call.1} parent=1 // pred_check_branch
      %19 = sbr.rel (0) target = $region5
    $region4: #{tpu_custom_call.1} parent=1 // pred_region
      %s21 = ssub.s32 128, 128
      %22 = vsyncadd [#allocation3], %s21
      %s24 = sshll.u32 [#allocation2], 4
      %s25 = int_to_ptr.vmem [resolvable:$true] %s24
      %27 = dma.hbm_to_vmem [thread:$0]  %s0, 128, %s25, [#allocation3]
    $region5: #{tpu_custom_call.1} parent=1 // pred_fallthru
      _
    // Predicated region
    $region6: #{tpu_custom_call.1} parent=1 // pred_check
      _
    $region7: #{tpu_custom_call.1} parent=1 // pred_check_branch
      %29 = sbr.rel (0) target = $region9
    $region8: #{tpu_custom_call.1} parent=1 // pred_region
      %s31 = ssub.s32 2048, 2048
      %32 = vsyncadd [#allocation6], %s31
      %s33 = sshll.u32 [#allocation5], 4
      %s34 = int_to_ptr.vmem [resolvable:$true] %s33
      %39 = dma.hbm_to_vmem [thread:$0]  %s1, 2048, %s34, [#allocation6], 128, 128, 8
    $region9: #{tpu_custom_call.1} parent=1 // pred_fallthru
      _
    // Predicated region
    $region10: #{tpu_custom_call.1} parent=1 // pred_check
      _
    $region11: #{tpu_custom_call.1} parent=1 // pred_check_branch
      %41 = sbr.rel (0) target = $region13
    $region12: #{tpu_custom_call.1} parent=1 // pred_region
      _
    $region13: #{tpu_custom_call.1} parent=1 // pred_fallthru
      _
    // Predicated region
    $region14: #{tpu_custom_call.1} parent=1 // pred_check
      _
    $region15: #{tpu_custom_call.1} parent=1 // pred_check_branch
      %43 = sbr.rel (0) target = $region17
    $region16: #{tpu_custom_call.1} parent=1 // pred_region
      _
    $region17: #{tpu_custom_call.1} parent=1 // pred_fallthru
      _
    // Predicated region
    $region18: #{tpu_custom_call.1} parent=1 // pred_check
      _
    $region19: #{tpu_custom_call.1} parent=1 // pred_check_branch
      %45 = sbr.rel (0) target = $region21
    $region20: #{tpu_custom_call.1} parent=1 // pred_region
      %s47 = ssub.s32 2048, 2048
      %48 = vsyncadd [#allocation6], %s47
      %s49 = sshll.u32 [#allocation7], 4
      %s50 = int_to_ptr.vmem [resolvable:$true] %s49
      %55 = dma.hbm_to_vmem [thread:$0]  %s4, 2048, %s50, [#allocation6], 128, 128, 8
    $region21: #{tpu_custom_call.1} parent=1 // pred_fallthru
      _
    // Predicated region
    $region22: #{tpu_custom_call.1} parent=1 // pred_check
      _
    $region23: #{tpu_custom_call.1} parent=1 // pred_check_branch
      %57 = sbr.rel (0) target = $region25
    $region24: #{tpu_custom_call.1} parent=1 // pred_region
      _
    $region25: #{tpu_custom_call.1} parent=1 // pred_fallthru
      _
    // Predicated region
    $region26: #{tpu_custom_call.1} parent=1 // pred_check
      _
    $region27: #{tpu_custom_call.1} parent=1 // pred_check_branch
      %59 = sbr.rel (0) target = $region29
    $region28: #{tpu_custom_call.1} parent=1 // pred_region
      _
    $region29: #{tpu_custom_call.1} parent=1 // pred_fallthru
      _
    // Predicated region
    $region30: #{tpu_custom_call.1} parent=1 // pred_check
      _
    $region31: #{tpu_custom_call.1} parent=1 // pred_check_branch
      %61 = sbr.rel (0) target = $region33
    $region32: #{tpu_custom_call.1} parent=1 // pred_region
      %s63 = ssub.s32 2048, 2048
      %64 = vsyncadd [#allocation9], %s63
      %s65 = sshll.u32 [#allocation8], 4
      %s66 = int_to_ptr.vmem [resolvable:$true] %s65
      %71 = dma.hbm_to_vmem [thread:$0]  %s7, 2048, %s66, [#allocation9], 128, 128, 8
    $region33: #{tpu_custom_call.1} parent=1 // pred_fallthru
      _
    // Predicated region
    $region34: #{tpu_custom_call.1} parent=1 // pred_check
      _
    $region35: #{tpu_custom_call.1} parent=1 // pred_check_branch
      %73 = sbr.rel (0) target = $region37
    $region36: #{tpu_custom_call.1} parent=1 // pred_region
      _
    $region37: #{tpu_custom_call.1} parent=1 // pred_fallthru
      _
    // Predicated region
    $region38: #{tpu_custom_call.1} parent=1 // pred_check
      _
    $region39: #{tpu_custom_call.1} parent=1 // pred_check_branch
      %75 = sbr.rel (0) target = $region41
    $region40: #{tpu_custom_call.1} parent=1 // pred_region
      %76 = dma.done [#allocation3], 128
    $region41: #{tpu_custom_call.1} parent=1 // pred_fallthru
      _
    // Predicated region
    $region42: #{tpu_custom_call.1} parent=1 // pred_check
      _
    $region43: #{tpu_custom_call.1} parent=1 // pred_check_branch
      %78 = sbr.rel (0) target = $region45
    $region44: #{tpu_custom_call.1} parent=1 // pred_region
      %79 = dma.done [#allocation6], 2048
    $region45: #{tpu_custom_call.1} parent=1 // pred_fallthru
      _
    // Predicated region
    $region46: #{tpu_custom_call.1} parent=1 // pred_check
      _
    $region47: #{tpu_custom_call.1} parent=1 // pred_check_branch
      %81 = sbr.rel (0) target = $region49
    $region48: #{tpu_custom_call.1} parent=1 // pred_region
      %82 = dma.done [#allocation6], 2048
    $region49: #{tpu_custom_call.1} parent=1 // pred_fallthru
      _
    // Predicated region
    $region50: #{tpu_custom_call.1} parent=1 // pred_check
      _
    $region51: #{tpu_custom_call.1} parent=1 // pred_check_branch
      %84 = sbr.rel (0) target = $region53
    $region52: #{tpu_custom_call.1} parent=1 // pred_region
      %85 = dma.done [#allocation9], 2048
    $region53: #{tpu_custom_call.1} parent=1 // pred_fallthru
      _
    %v86 = vld [vmem:[#allocation2] sm:$0xff]
    %v87 = vld [vmem:[#allocation5] sm:$0xff]
    %v88 = vld [vmem:[#allocation5 + $0x8] sm:$0xff]
    %v89 = vld [vmem:[#allocation5 + $0x10] sm:$0xff]
    %v90 = vld [vmem:[#allocation5 + $0x18] sm:$0xff]
    %v91 = vld [vmem:[#allocation5 + $0x20] sm:$0xff]
    %v92 = vld [vmem:[#allocation5 + $0x28] sm:$0xff]
    %v93 = vld [vmem:[#allocation5 + $0x30] sm:$0xff]
    %v94 = vld [vmem:[#allocation5 + $0x38] sm:$0xff]
    %v95 = vld [vmem:[#allocation5 + $0x40] sm:$0xff]
    %v96 = vld [vmem:[#allocation5 + $0x48] sm:$0xff]
    %v97 = vld [vmem:[#allocation5 + $0x50] sm:$0xff]
    %v98 = vld [vmem:[#allocation5 + $0x58] sm:$0xff]
    %v99 = vld [vmem:[#allocation5 + $0x60] sm:$0xff]
    %v100 = vld [vmem:[#allocation5 + $0x68] sm:$0xff]
    %v101 = vld [vmem:[#allocation5 + $0x70] sm:$0xff]
    %v102 = vld [vmem:[#allocation5 + $0x78] sm:$0xff]
    %v103 = vld [vmem:[%s2] sm:$0x1]
    %v104 = vld [vmem:[%s3] sm:$0x1]
    %105 = vmatprep.subr.mxu0 0.0
    %106 = vmatpush1.msra.mxu0 %v87
    %107 = vmatprep.subr.mxu0 0.0
    %108 = vmatpush1.msra.mxu0 %v88
    %109 = vmatprep.subr.mxu0 0.0
    %110 = vmatpush1.msra.mxu0 %v89
    %111 = vmatprep.subr.mxu0 0.0
    %112 = vmatpush1.msra.mxu0 %v90
    %113 = vmatprep.subr.mxu0 0.0
    %114 = vmatpush1.msra.mxu0 %v91
    %115 = vmatprep.subr.mxu0 0.0
    %116 = vmatpush1.msra.mxu0 %v92
    %117 = vmatprep.subr.mxu0 0.0
    %118 = vmatpush1.msra.mxu0 %v93
    %119 = vmatprep.subr.mxu0 0.0
    %120 = vmatpush1.msra.mxu0 %v94
    %121 = vmatprep.subr.mxu0 0.0
    %122 = vmatpush1.msra.mxu0 %v95
    %123 = vmatprep.subr.mxu0 0.0
    %124 = vmatpush1.msra.mxu0 %v96
    %125 = vmatprep.subr.mxu0 0.0
    %126 = vmatpush1.msra.mxu0 %v97
    %127 = vmatprep.subr.mxu0 0.0
    %128 = vmatpush1.msra.mxu0 %v98
    %129 = vmatprep.subr.mxu0 0.0
    %130 = vmatpush1.msra.mxu0 %v99
    %131 = vmatprep.subr.mxu0 0.0
    %132 = vmatpush1.msra.mxu0 %v100
    %133 = vmatprep.subr.mxu0 0.0
    %134 = vmatpush1.msra.mxu0 %v101
    %135 = vmatprep.subr.mxu0 0.0
    %136 = vmatpush1.msra.mxu0 %v102
    %137 = vmatprep.subr.mxu0 0.0
    %138 = vmatpush1.msra.mxu0 0.0
    %139 = vmatprep.subr.mxu0 0.0
    %140 = vmatpush1.msra.mxu0 0.0
    %141 = vmatprep.subr.mxu0 0.0
    %142 = vmatpush1.msra.mxu0 0.0
    %143 = vmatprep.subr.mxu0 0.0
    %144 = vmatpush1.msra.mxu0 0.0
    %145 = vmatprep.subr.mxu0 0.0
    %146 = vmatpush1.msra.mxu0 0.0
    %147 = vmatprep.subr.mxu0 0.0
    %148 = vmatpush1.msra.mxu0 0.0
    %149 = vmatprep.subr.mxu0 0.0
    %150 = vmatpush1.msra.mxu0 0.0
    %151 = vmatprep.subr.mxu0 0.0
    %152 = vmatpush1.msra.mxu0 0.0
    %153 = vmatprep.subr.mxu0 0.0
    %154 = vmatpush1.msra.mxu0 0.0
    %155 = vmatprep.subr.mxu0 0.0
    %156 = vmatpush1.msra.mxu0 0.0
    %157 = vmatprep.subr.mxu0 0.0
    %158 = vmatpush1.msra.mxu0 0.0
    %159 = vmatprep.subr.mxu0 0.0
    %160 = vmatpush1.msra.mxu0 0.0
    %161 = vmatprep.subr.mxu0 0.0
    %162 = vmatpush1.msra.mxu0 0.0
    %163 = vmatprep.subr.mxu0 0.0
    %164 = vmatpush1.msra.mxu0 0.0
    %165 = vmatprep.subr.mxu0 0.0
    %166 = vmatpush1.msra.mxu0 0.0
    %167 = vmatprep.subr.mxu0 0.0
    %168 = vmatpush1.msra.mxu0 0.0
    %169 = vmatprep.mubr.f32.mxu0 0.0
    %170 = vmatmul.mubr.f32.gmra.mrb[0].mxu0 %v86
    %v171 = vpop.f32.mrb[0].mxu0
    %v172 = vadd.f32 0.0, %v171
    %v173 = vpop.f32.mrb[0].mxu0
    %174 = vdwg.mxu0
    %v175 = vrot.slane %v172, 4
    %v176 = vadd.f32 %v172, %v175
    %v177 = vrot.slane %v176, 2
    %v178 = vadd.f32 %v176, %v177
    %v179 = vrot.slane %v178, 1
    %v180 = vadd.f32 %v178, %v179
    %v181 = vmul.f32 %v180, 0.125
    %v182 = vsub.f32 %v172, %v181
    %v183 = vmul.f32 %v182, %v182
    %v184 = vrot.slane %v183, 4
    %v185 = vadd.f32 %v183, %v184
    %v186 = vrot.slane %v185, 2
    %v187 = vadd.f32 %v185, %v186
    %v188 = vrot.slane %v187, 1
    %v189 = vadd.f32 %v187, %v188
    %v190 = vmul.f32 %v189, 0.125
    %v191 = vadd.f32 %v190, 1e-05
    %v192 = vrsqrt.pop %v191
    %v193 = vmul.f32 %v182, %v192
    %v195 = vlaneseq
    %v196 = vshrl.u32 %v195, 7
    %v197 = vsub.s32 0, %v196
    %v198 = vrot.slane %v103, %v197
    %v200 = vmul.f32 %v193, %v198
    %v202 = vlaneseq
    %v203 = vshrl.u32 %v202, 7
    %v204 = vsub.s32 0, %v203
    %v205 = vrot.slane %v104, %v204
    %v207 = vadd.f32 %v200, %v205
    %v208 = vmax.f32 %v207, 0.0
    %v209 = vld [vmem:[#allocation7] sm:$0xff]
    %v210 = vld [vmem:[#allocation7 + $0x8] sm:$0xff]
    %v211 = vld [vmem:[#allocation7 + $0x10] sm:$0xff]
    %v212 = vld [vmem:[#allocation7 + $0x18] sm:$0xff]
    %v213 = vld [vmem:[#allocation7 + $0x20] sm:$0xff]
    %v214 = vld [vmem:[#allocation7 + $0x28] sm:$0xff]
    %v215 = vld [vmem:[#allocation7 + $0x30] sm:$0xff]
    %v216 = vld [vmem:[#allocation7 + $0x38] sm:$0xff]
    %v217 = vld [vmem:[#allocation7 + $0x40] sm:$0xff]
    %v218 = vld [vmem:[#allocation7 + $0x48] sm:$0xff]
    %v219 = vld [vmem:[#allocation7 + $0x50] sm:$0xff]
    %v220 = vld [vmem:[#allocation7 + $0x58] sm:$0xff]
    %v221 = vld [vmem:[#allocation7 + $0x60] sm:$0xff]
    %v222 = vld [vmem:[#allocation7 + $0x68] sm:$0xff]
    %v223 = vld [vmem:[#allocation7 + $0x70] sm:$0xff]
    %v224 = vld [vmem:[#allocation7 + $0x78] sm:$0xff]
    %v225 = vld [vmem:[%s5] sm:$0x1]
    %v226 = vld [vmem:[%s6] sm:$0x1]
    %227 = vmatprep.subr.mxu0 0.0
    %228 = vmatpush1.msra.mxu0 %v209
    %229 = vmatprep.subr.mxu0 0.0
    %230 = vmatpush1.msra.mxu0 %v210
    %231 = vmatprep.subr.mxu0 0.0
    %232 = vmatpush1.msra.mxu0 %v211
    %233 = vmatprep.subr.mxu0 0.0
    %234 = vmatpush1.msra.mxu0 %v212
    %235 = vmatprep.subr.mxu0 0.0
    %236 = vmatpush1.msra.mxu0 %v213
    %237 = vmatprep.subr.mxu0 0.0
    %238 = vmatpush1.msra.mxu0 %v214
    %239 = vmatprep.subr.mxu0 0.0
    %240 = vmatpush1.msra.mxu0 %v215
    %241 = vmatprep.subr.mxu0 0.0
    %242 = vmatpush1.msra.mxu0 %v216
    %243 = vmatprep.subr.mxu0 0.0
    %244 = vmatpush1.msra.mxu0 %v217
    %245 = vmatprep.subr.mxu0 0.0
    %246 = vmatpush1.msra.mxu0 %v218
    %247 = vmatprep.subr.mxu0 0.0
    %248 = vmatpush1.msra.mxu0 %v219
    %249 = vmatprep.subr.mxu0 0.0
    %250 = vmatpush1.msra.mxu0 %v220
    %251 = vmatprep.subr.mxu0 0.0
    %252 = vmatpush1.msra.mxu0 %v221
    %253 = vmatprep.subr.mxu0 0.0
    %254 = vmatpush1.msra.mxu0 %v222
    %255 = vmatprep.subr.mxu0 0.0
    %256 = vmatpush1.msra.mxu0 %v223
    %257 = vmatprep.subr.mxu0 0.0
    %258 = vmatpush1.msra.mxu0 %v224
    %259 = vmatprep.subr.mxu0 0.0
    %260 = vmatpush1.msra.mxu0 0.0
    %261 = vmatprep.subr.mxu0 0.0
    %262 = vmatpush1.msra.mxu0 0.0
    %263 = vmatprep.subr.mxu0 0.0
    %264 = vmatpush1.msra.mxu0 0.0
    %265 = vmatprep.subr.mxu0 0.0
    %266 = vmatpush1.msra.mxu0 0.0
    %267 = vmatprep.subr.mxu0 0.0
    %268 = vmatpush1.msra.mxu0 0.0
    %269 = vmatprep.subr.mxu0 0.0
    %270 = vmatpush1.msra.mxu0 0.0
    %271 = vmatprep.subr.mxu0 0.0
    %272 = vmatpush1.msra.mxu0 0.0
    %273 = vmatprep.subr.mxu0 0.0
    %274 = vmatpush1.msra.mxu0 0.0
    %275 = vmatprep.subr.mxu0 0.0
    %276 = vmatpush1.msra.mxu0 0.0
    %277 = vmatprep.subr.mxu0 0.0
    %278 = vmatpush1.msra.mxu0 0.0
    %279 = vmatprep.subr.mxu0 0.0
    %280 = vmatpush1.msra.mxu0 0.0
    %281 = vmatprep.subr.mxu0 0.0
    %282 = vmatpush1.msra.mxu0 0.0
    %283 = vmatprep.subr.mxu0 0.0
    %284 = vmatpush1.msra.mxu0 0.0
    %285 = vmatprep.subr.mxu0 0.0
    %286 = vmatpush1.msra.mxu0 0.0
    %287 = vmatprep.subr.mxu0 0.0
    %288 = vmatpush1.msra.mxu0 0.0
    %289 = vmatprep.subr.mxu0 0.0
    %290 = vmatpush1.msra.mxu0 0.0
    %291 = vmatprep.mubr.f32.mxu0 0.0
    %292 = vmatmul.mubr.f32.gmra.mrb[0].mxu0 %v208
    %v293 = vpop.f32.mrb[0].mxu0
    %v294 = vadd.f32 0.0, %v293
    %v295 = vpop.f32.mrb[0].mxu0
    %296 = vdwg.mxu0
    %v297 = vrot.slane %v294, 4
    %v298 = vadd.f32 %v294, %v297
    %v299 = vrot.slane %v298, 2
    %v300 = vadd.f32 %v298, %v299
    %v301 = vrot.slane %v300, 1
    %v302 = vadd.f32 %v300, %v301
    %v303 = vmul.f32 %v302, 0.125
    %v304 = vsub.f32 %v294, %v303
    %v305 = vmul.f32 %v304, %v304
    %v306 = vrot.slane %v305, 4
    %v307 = vadd.f32 %v305, %v306
    %v308 = vrot.slane %v307, 2
    %v309 = vadd.f32 %v307, %v308
    %v310 = vrot.slane %v309, 1
    %v311 = vadd.f32 %v309, %v310
    %v312 = vmul.f32 %v311, 0.125
    %v313 = vadd.f32 %v312, 1e-05
    %v314 = vrsqrt.pop %v313
    %v315 = vmul.f32 %v304, %v314
    %v317 = vlaneseq
    %v318 = vshrl.u32 %v317, 7
    %v319 = vsub.s32 0, %v318
    %v320 = vrot.slane %v225, %v319
    %v322 = vmul.f32 %v315, %v320
    %v324 = vlaneseq
    %v325 = vshrl.u32 %v324, 7
    %v326 = vsub.s32 0, %v325
    %v327 = vrot.slane %v226, %v326
    %v329 = vadd.f32 %v322, %v327
    %v330 = vmax.f32 %v329, 0.0
    %v331 = vld [vmem:[#allocation8] sm:$0xff]
    %v332 = vld [vmem:[#allocation8 + $0x8] sm:$0xff]
    %v333 = vld [vmem:[#allocation8 + $0x10] sm:$0xff]
    %v334 = vld [vmem:[#allocation8 + $0x18] sm:$0xff]
    %v335 = vld [vmem:[#allocation8 + $0x20] sm:$0xff]
    %v336 = vld [vmem:[#allocation8 + $0x28] sm:$0xff]
    %v337 = vld [vmem:[#allocation8 + $0x30] sm:$0xff]
    %v338 = vld [vmem:[#allocation8 + $0x38] sm:$0xff]
    %v339 = vld [vmem:[#allocation8 + $0x40] sm:$0xff]
    %v340 = vld [vmem:[#allocation8 + $0x48] sm:$0xff]
    %v341 = vld [vmem:[#allocation8 + $0x50] sm:$0xff]
    %v342 = vld [vmem:[#allocation8 + $0x58] sm:$0xff]
    %v343 = vld [vmem:[#allocation8 + $0x60] sm:$0xff]
    %v344 = vld [vmem:[#allocation8 + $0x68] sm:$0xff]
    %v345 = vld [vmem:[#allocation8 + $0x70] sm:$0xff]
    %v346 = vld [vmem:[#allocation8 + $0x78] sm:$0xff]
    %v347 = vld [vmem:[%s8] sm:$0x1]
    %v349 = vlaneseq
    %v350 = vshrl.u32 %v349, 7
    %v351 = vsub.s32 0, %v350
    %v352 = vrot.slane %v347, %v351
    %354 = vmatprep.subr.mxu0 0.0
    %355 = vmatpush1.msra.mxu0 %v331
    %356 = vmatprep.subr.mxu0 0.0
    %357 = vmatpush1.msra.mxu0 %v332
    %358 = vmatprep.subr.mxu0 0.0
    %359 = vmatpush1.msra.mxu0 %v333
    %360 = vmatprep.subr.mxu0 0.0
    %361 = vmatpush1.msra.mxu0 %v334
    %362 = vmatprep.subr.mxu0 0.0
    %363 = vmatpush1.msra.mxu0 %v335
    %364 = vmatprep.subr.mxu0 0.0
    %365 = vmatpush1.msra.mxu0 %v336
    %366 = vmatprep.subr.mxu0 0.0
    %367 = vmatpush1.msra.mxu0 %v337
    %368 = vmatprep.subr.mxu0 0.0
    %369 = vmatpush1.msra.mxu0 %v338
    %370 = vmatprep.subr.mxu0 0.0
    %371 = vmatpush1.msra.mxu0 %v339
    %372 = vmatprep.subr.mxu0 0.0
    %373 = vmatpush1.msra.mxu0 %v340
    %374 = vmatprep.subr.mxu0 0.0
    %375 = vmatpush1.msra.mxu0 %v341
    %376 = vmatprep.subr.mxu0 0.0
    %377 = vmatpush1.msra.mxu0 %v342
    %378 = vmatprep.subr.mxu0 0.0
    %379 = vmatpush1.msra.mxu0 %v343
    %380 = vmatprep.subr.mxu0 0.0
    %381 = vmatpush1.msra.mxu0 %v344
    %382 = vmatprep.subr.mxu0 0.0
    %383 = vmatpush1.msra.mxu0 %v345
    %384 = vmatprep.subr.mxu0 0.0
    %385 = vmatpush1.msra.mxu0 %v346
    %386 = vmatprep.subr.mxu0 0.0
    %387 = vmatpush1.msra.mxu0 0.0
    %388 = vmatprep.subr.mxu0 0.0
    %389 = vmatpush1.msra.mxu0 0.0
    %390 = vmatprep.subr.mxu0 0.0
    %391 = vmatpush1.msra.mxu0 0.0
    %392 = vmatprep.subr.mxu0 0.0
    %393 = vmatpush1.msra.mxu0 0.0
    %394 = vmatprep.subr.mxu0 0.0
    %395 = vmatpush1.msra.mxu0 0.0
    %396 = vmatprep.subr.mxu0 0.0
    %397 = vmatpush1.msra.mxu0 0.0
    %398 = vmatprep.subr.mxu0 0.0
    %399 = vmatpush1.msra.mxu0 0.0
    %400 = vmatprep.subr.mxu0 0.0
    %401 = vmatpush1.msra.mxu0 0.0
    %402 = vmatprep.subr.mxu0 0.0
    %403 = vmatpush1.msra.mxu0 0.0
    %404 = vmatprep.subr.mxu0 0.0
    %405 = vmatpush1.msra.mxu0 0.0
    %406 = vmatprep.subr.mxu0 0.0
    %407 = vmatpush1.msra.mxu0 0.0
    %408 = vmatprep.subr.mxu0 0.0
    %409 = vmatpush1.msra.mxu0 0.0
    %410 = vmatprep.subr.mxu0 0.0
    %411 = vmatpush1.msra.mxu0 0.0
    %412 = vmatprep.subr.mxu0 0.0
    %413 = vmatpush1.msra.mxu0 0.0
    %414 = vmatprep.subr.mxu0 0.0
    %415 = vmatpush1.msra.mxu0 0.0
    %416 = vmatprep.subr.mxu0 0.0
    %417 = vmatpush1.msra.mxu0 0.0
    %418 = vmatprep.mubr.f32.mxu0 0.0
    %419 = vmatmul.mubr.f32.gmra.mrb[0].mxu0 %v330
    %v420 = vpop.f32.mrb[0].mxu0
    %v421 = vadd.f32 %v352, %v420
    %v422 = vpop.f32.mrb[0].mxu0
    %423 = vdwg.mxu0
    %424 = vst [vmem:[#allocation10] sm:$0xff] %v421
    // Predicated region
    $region54: #{tpu_custom_call.1} parent=1 // pred_check
      _
    $region55: #{tpu_custom_call.1} parent=1 // pred_check_branch
      %426 = sbr.rel (0) target = $region57
    $region56: #{tpu_custom_call.1} parent=1 // pred_region
      %s428 = ssub.s32 128, 128
      %429 = vsyncadd [#allocation4], %s428
      %s431 = sshll.u32 [#allocation10], 4
      %s432 = int_to_ptr.vmem [resolvable:$true] %s431
      %434 = dma.vmem_to_hbm [thread:$0]  %s432, 128, %s9, [#allocation4]
    $region57: #{tpu_custom_call.1} parent=1 // pred_fallthru
      _
    // Predicated region
    $region58: #{tpu_custom_call.1} parent=1 // pred_check
      _
    $region59: #{tpu_custom_call.1} parent=1 // pred_check_branch
      %436 = sbr.rel (0) target = $region61
    $region60: #{tpu_custom_call.1} parent=1 // pred_region
      %437 = dma.done [#allocation4], 128
    $region61: #{tpu_custom_call.1} parent=1 // pred_fallthru
      _
    %438 = vsyncpa [#allocation3], 1
    %439 = vsyncpa [#allocation6], 1
    %440 = vsyncpa [#allocation9], 1
    %441 = vsyncpa [#allocation4], 1

</llo_original>
